<compile_context>
chip_gen: v5e
topology: v5e:2x2
jax: 0.10.0
libtpu: 0.0.40
codegen_flags: <defaults>
</compile_context>

<pallas_src>
import functools

import jax
import jax.numpy as jnp
from jax.experimental import pallas as pl
from jax.experimental.pallas import tpu as pltpu

BATCH_SIZE = 16  # hard-coded module-level constant in the PyTorch script
LANE = 128
# Pull the whole table into VMEM when it fits comfortably even on v7x
# (64 MiB physical / 32 MiB default scoped VMEM).  Larger tables take the HBM gather path.
_VMEM_TABLE_BYTES = 8 * 1024 * 1024


# ----------------------------------------------------------------------------------------------
# Primary path: embedding table resident in VMEM, gather+mean fused into one matmul.
# ----------------------------------------------------------------------------------------------
def _dense_kernel(ids_ref, emb_ref, w_ref, b_ref, out_ref):
    # ids_ref: VMEM (bb, c)      int32 token ids for this batch block
    # emb_ref: VMEM (vocab, D)   embedding table (full, resident)
    # w_ref:   VMEM (D, Cpad)    fc weight, pre-transposed + lane-padded
    # b_ref:   VMEM (1, Cpad)    fc bias, lane-padded
    # out_ref: VMEM (bb, Cpad)
    bb, c = ids_ref.shape
    vocab = emb_ref.shape[0]

    ids = ids_ref[...]                                                    # (bb, c)
    viota = jax.lax.broadcasted_iota(jnp.int32, (bb, vocab), 1)           # (bb, vocab)

    # Average-count matrix: weights[b, v] = (# of times token v appears in row b) / c.
    # c is a small static int -> unrolled VPU compares; for very large c switch to a fori_loop.
    weights = jnp.zeros((bb, vocab), jnp.float32)
    for k in range(c):
        weights = weights + (ids[:, k : k + 1] == viota).astype(jnp.float32)
    weights = weights * (1.0 / c)

    # Fused gather + avg_pool1d(kernel_size=c):  (bb, vocab) @ (vocab, D) on the MXU.
    pooled = jnp.dot(weights, emb_ref[...].astype(jnp.float32),
                     preferred_element_type=jnp.float32)                  # (bb, D)

    # Batched fc projection + single lane-dense output store.
    out_ref[...] = (
        jnp.dot(pooled, w_ref[...], preferred_element_type=jnp.float32) + b_ref[...]
    ).astype(out_ref.dtype)


# ----------------------------------------------------------------------------------------------
# Large-vocab fallback: table stays in HBM, bulk-issued row-gather DMAs, single wait phase.
# (Not exercised by the small example below; kept for big embedding tables.)
# ----------------------------------------------------------------------------------------------
def _gather_kernel(ids_ref, emb_hbm, w_ref, b_ref, out_ref, stage_ref, sem, *, batch, c):
    # ids_ref:   SMEM (batch*c,)       int32 token ids (scalar-prefetched)
    # emb_hbm:   HBM  (vocab, D)       embedding table (raw ref, manual DMA gather)
    # stage_ref: VMEM (batch*c, D)     staging for all gathered rows (keep under ~16 MiB on v7x)
    # sem:       scalar DMA semaphore shared by all row copies
    n = batch * c
    copies = []
    # Issue every row gather up-front so the DMA engine keeps them all in flight; all SMEM id
    # reads happen before any .wait() (waits break SMEM sst->sld forwarding).
    for i in range(n):
        cp = pltpu.make_async_copy(
            emb_hbm.at[pl.ds(ids_ref[i], 1), :],
            stage_ref.at[pl.ds(i, 1), :],
            sem,
        )
        cp.start()
        copies.append(cp)
    for cp in copies:        # one wait phase; sem accumulates, equal-sized copies
        cp.wait()

    # Dense pool: rows b*c + k for fixed k are stride-c apart -> c strided-sublane adds.
    d = stage_ref.shape[1]
    acc = jnp.zeros((batch, d), jnp.float32)
    for k in range(c):
        acc += stage_ref[pl.ds(k, batch, stride=c), :].astype(jnp.float32)
    pooled = acc * (1.0 / c)

    out_ref[...] = (
        jnp.dot(pooled, w_ref[...], preferred_element_type=jnp.float32) + b_ref[...]
    ).astype(out_ref.dtype)


# ----------------------------------------------------------------------------------------------
# Wrapper
# ----------------------------------------------------------------------------------------------
def text_sentiment_forward(text, emb_w, fc_w, fc_b, batch_size=BATCH_SIZE):
    """text: (N,) int token ids. Returns (batch_size, num_class) float32."""
    n = text.shape[0]
    c = n // batch_size
    assert c >= 1, "need at least batch_size tokens"
    vocab, embed_dim = emb_w.shape
    num_class = fc_w.shape[0]

    # Glue (truncation / clamp / transpose / lane-padding) stays in plain JAX.
    # NOTE: clip silently remaps out-of-range ids (PyTorch nn.Embedding would raise).
    ids = jnp.clip(text[: c * batch_size].astype(jnp.int32), 0, vocab - 1)
    c_pad = ((num_class + LANE - 1) // LANE) * LANE                     # lane-dense output
    w_t = jnp.zeros((embed_dim, c_pad), jnp.float32).at[:, :num_class].set(
        fc_w.T.astype(jnp.float32))
    b2 = jnp.zeros((1, c_pad), jnp.float32).at[:, :num_class].set(fc_b.astype(jnp.float32))

    table_bytes = vocab * embed_dim * jnp.dtype(emb_w.dtype).itemsize

    if table_bytes <= _VMEM_TABLE_BYTES:
        # ---- primary path: table in VMEM, no gather DMAs at all ----
        ids2 = ids.reshape(batch_size, c)
        # Split batch across the grid (parallel) so v7x's 2 TensorCores share it; requires the
        # per-block row count to stay a multiple of 8 (sublane tiling).
        bb = batch_size // 2 if batch_size % 16 == 0 else batch_size
        grid = (batch_size // bb,)

        out = pl.pallas_call(
            _dense_kernel,
            out_shape=jax.ShapeDtypeStruct((batch_size, c_pad), jnp.float32),
            grid_spec=pltpu.PrefetchScalarGridSpec(
                num_scalar_prefetch=0,
                grid=grid,
                in_specs=[
                    pl.BlockSpec((bb, c), lambda i: (i, 0)),                 # ids block
                    pl.BlockSpec((vocab, embed_dim), lambda i: (0, 0)),      # full table, resident
                    pl.BlockSpec((embed_dim, c_pad), lambda i: (0, 0)),      # fc weight
                    pl.BlockSpec((1, c_pad), lambda i: (0, 0)),              # fc bias
                ],
                out_specs=pl.BlockSpec((bb, c_pad), lambda i: (i, 0)),
            ),
            compiler_params=pltpu.CompilerParams(
                dimension_semantics=("parallel",)),
        )(ids2, emb_w, w_t, b2)
    else:
        # ---- large-vocab fallback: HBM table, bulk-issued row gathers ----
        kernel = functools.partial(_gather_kernel, batch=batch_size, c=c)
        out = pl.pallas_call(
            kernel,
            out_shape=jax.ShapeDtypeStruct((batch_size, c_pad), jnp.float32),
            grid_spec=pltpu.PrefetchScalarGridSpec(
                num_scalar_prefetch=1,                     # ids -> SMEM before the grid runs
                grid=(1,),
                in_specs=[
                    pl.BlockSpec(memory_space=pl.ANY),                       # table stays in HBM
                    pl.BlockSpec((embed_dim, c_pad), lambda i, ids: (0, 0)),
                    pl.BlockSpec((1, c_pad), lambda i, ids: (0, 0)),
                ],
                out_specs=pl.BlockSpec((batch_size, c_pad), lambda i, ids: (0, 0)),
                scratch_shapes=[
                    pltpu.VMEM((batch_size * c, embed_dim), emb_w.dtype),    # bulk staging
                    pltpu.SemaphoreType.DMA(()),                             # one shared sem
                ],
            ),
            compiler_params=pltpu.CompilerParams(
                dimension_semantics=("arbitrary",)),
        )(ids, emb_w, w_t, b2)

    return out[:, :num_class]


def _reference_forward(text, emb_w, fc_w, fc_b, batch_size=BATCH_SIZE):
    n = text.shape[0]
    c = n // batch_size
    ids = text[: c * batch_size].reshape(batch_size, c)
    emb = emb_w[ids]                       # (B, c, D)
    pooled = emb.mean(axis=1)              # avg_pool1d(kernel_size=c) equivalent
    return pooled @ fc_w.T + fc_b


if __name__ == "__main__":
    vocab_size = 50
    embed_dim = 32
    num_class = 4
    seq_len = 131  # not a multiple of batch_size -> exercises the truncation path (c = 8)

    key = jax.random.PRNGKey(0)
    k_emb, k_fc, k_txt = jax.random.split(key, 3)

    # deterministic init matching init_weights(): uniform(-0.5, 0.5) weights, zero bias
    initrange = 0.5
    emb_w = jax.random.uniform(k_emb, (vocab_size, embed_dim), jnp.float32, -initrange, initrange)
    fc_w = jax.random.uniform(k_fc, (num_class, embed_dim), jnp.float32, -initrange, initrange)
    fc_b = jnp.zeros((num_class,), jnp.float32)

    text = jax.random.randint(k_txt, (seq_len,), 0, vocab_size, dtype=jnp.int32)

    out = text_sentiment_forward(text, emb_w, fc_w, fc_b)
    out = jax.block_until_ready(out)

    ref = _reference_forward(text, emb_w, fc_w, fc_b)
    assert out.shape == (BATCH_SIZE, num_class)
    assert jnp.allclose(out, ref, atol=1e-5, rtol=1e-5), "mismatch vs reference"

    print("KERNEL_OK")
</pallas_src>

<mosaic_0001>
module attributes {stable_mosaic.version = 11 : i64} {
  func.func @_dense_kernel(%arg0: i32, %arg1: memref<8x8xi32, #tpu.memory_space<vmem>>, %arg2: memref<50x32xf32, #tpu.memory_space<vmem>>, %arg3: memref<32x128xf32, #tpu.memory_space<vmem>>, %arg4: memref<1x128xf32, #tpu.memory_space<vmem>>, %arg5: memref<8x128xf32, #tpu.memory_space<vmem>>) attributes {dimension_semantics = [#tpu.dimension_semantics<parallel>], iteration_bounds = array<i64: 2>, scalar_prefetch = 0 : i64, scratch_operands = 0 : i64, tpu.core_type = #tpu.core_type<tc>, window_params = [{transform_indices = @transform_0, window_bounds = array<i64: 8, 8>}, {pipeline_mode = #tpu.pipeline_mode<synchronous>, transform_indices = @transform_1, window_bounds = array<i64: 50, 32>}, {pipeline_mode = #tpu.pipeline_mode<synchronous>, transform_indices = @transform_2, window_bounds = array<i64: 32, 128>}, {pipeline_mode = #tpu.pipeline_mode<synchronous>, transform_indices = @transform_3, window_bounds = array<i64: 1, 128>}, {transform_indices = @transform_4, window_bounds = array<i64: 8, 128>}]} {
    %c0 = arith.constant 0 : index
    %c0_0 = arith.constant 0 : index
    %0 = vector.load %arg1[%c0, %c0_0] : memref<8x8xi32, #tpu.memory_space<vmem>>, vector<8x8xi32>
    %1 = tpu.iota {dimensions = array<i32: 1>} : vector<8x50xi32>
    %cst = arith.constant 0.000000e+00 : f32
    %2 = vector.broadcast %cst : f32 to vector<8x50xf32>
    %3 = vector.extract_strided_slice %0 {offsets = [0, 0], sizes = [8, 1], strides = [1, 1]} : vector<8x8xi32> to vector<8x1xi32>
    %4 = vector.broadcast %3 : vector<8x1xi32> to vector<8x50xi32>
    %5 = arith.cmpi eq, %4, %1 : vector<8x50xi32>
    %6 = arith.extui %5 : vector<8x50xi1> to vector<8x50xi32>
    %7 = arith.sitofp %6 : vector<8x50xi32> to vector<8x50xf32>
    %8 = arith.addf %2, %7 : vector<8x50xf32>
    %9 = vector.extract_strided_slice %0 {offsets = [0, 1], sizes = [8, 1], strides = [1, 1]} : vector<8x8xi32> to vector<8x1xi32>
    %10 = vector.broadcast %9 : vector<8x1xi32> to vector<8x50xi32>
    %11 = arith.cmpi eq, %10, %1 : vector<8x50xi32>
    %12 = arith.extui %11 : vector<8x50xi1> to vector<8x50xi32>
    %13 = arith.sitofp %12 : vector<8x50xi32> to vector<8x50xf32>
    %14 = arith.addf %8, %13 : vector<8x50xf32>
    %15 = vector.extract_strided_slice %0 {offsets = [0, 2], sizes = [8, 1], strides = [1, 1]} : vector<8x8xi32> to vector<8x1xi32>
    %16 = vector.broadcast %15 : vector<8x1xi32> to vector<8x50xi32>
    %17 = arith.cmpi eq, %16, %1 : vector<8x50xi32>
    %18 = arith.extui %17 : vector<8x50xi1> to vector<8x50xi32>
    %19 = arith.sitofp %18 : vector<8x50xi32> to vector<8x50xf32>
    %20 = arith.addf %14, %19 : vector<8x50xf32>
    %21 = vector.extract_strided_slice %0 {offsets = [0, 3], sizes = [8, 1], strides = [1, 1]} : vector<8x8xi32> to vector<8x1xi32>
    %22 = vector.broadcast %21 : vector<8x1xi32> to vector<8x50xi32>
    %23 = arith.cmpi eq, %22, %1 : vector<8x50xi32>
    %24 = arith.extui %23 : vector<8x50xi1> to vector<8x50xi32>
    %25 = arith.sitofp %24 : vector<8x50xi32> to vector<8x50xf32>
    %26 = arith.addf %20, %25 : vector<8x50xf32>
    %27 = vector.extract_strided_slice %0 {offsets = [0, 4], sizes = [8, 1], strides = [1, 1]} : vector<8x8xi32> to vector<8x1xi32>
    %28 = vector.broadcast %27 : vector<8x1xi32> to vector<8x50xi32>
    %29 = arith.cmpi eq, %28, %1 : vector<8x50xi32>
    %30 = arith.extui %29 : vector<8x50xi1> to vector<8x50xi32>
    %31 = arith.sitofp %30 : vector<8x50xi32> to vector<8x50xf32>
    %32 = arith.addf %26, %31 : vector<8x50xf32>
    %33 = vector.extract_strided_slice %0 {offsets = [0, 5], sizes = [8, 1], strides = [1, 1]} : vector<8x8xi32> to vector<8x1xi32>
    %34 = vector.broadcast %33 : vector<8x1xi32> to vector<8x50xi32>
    %35 = arith.cmpi eq, %34, %1 : vector<8x50xi32>
    %36 = arith.extui %35 : vector<8x50xi1> to vector<8x50xi32>
    %37 = arith.sitofp %36 : vector<8x50xi32> to vector<8x50xf32>
    %38 = arith.addf %32, %37 : vector<8x50xf32>
    %39 = vector.extract_strided_slice %0 {offsets = [0, 6], sizes = [8, 1], strides = [1, 1]} : vector<8x8xi32> to vector<8x1xi32>
    %40 = vector.broadcast %39 : vector<8x1xi32> to vector<8x50xi32>
    %41 = arith.cmpi eq, %40, %1 : vector<8x50xi32>
    %42 = arith.extui %41 : vector<8x50xi1> to vector<8x50xi32>
    %43 = arith.sitofp %42 : vector<8x50xi32> to vector<8x50xf32>
    %44 = arith.addf %38, %43 : vector<8x50xf32>
    %45 = vector.extract_strided_slice %0 {offsets = [0, 7], sizes = [8, 1], strides = [1, 1]} : vector<8x8xi32> to vector<8x1xi32>
    %46 = vector.broadcast %45 : vector<8x1xi32> to vector<8x50xi32>
    %47 = arith.cmpi eq, %46, %1 : vector<8x50xi32>
    %48 = arith.extui %47 : vector<8x50xi1> to vector<8x50xi32>
    %49 = arith.sitofp %48 : vector<8x50xi32> to vector<8x50xf32>
    %50 = arith.addf %44, %49 : vector<8x50xf32>
    %cst_1 = arith.constant 1.250000e-01 : f32
    %51 = vector.broadcast %cst_1 : f32 to vector<8x50xf32>
    %52 = arith.mulf %50, %51 : vector<8x50xf32>
    %c0_2 = arith.constant 0 : index
    %c0_3 = arith.constant 0 : index
    %53 = vector.load %arg2[%c0_2, %c0_3] : memref<50x32xf32, #tpu.memory_space<vmem>>, vector<50x32xf32>
    %cst_4 = arith.constant dense<0.000000e+00> : vector<8x32xf32>
    %54 = tpu.matmul %52, %53, %cst_4 {dimension_numbers = #tpu.dot_dimension_numbers<[1], [0], [0], [1], [0, 0, 1, 1], [], []>} : vector<8x50xf32>, vector<50x32xf32>, vector<8x32xf32> -> vector<8x32xf32>
    %c0_5 = arith.constant 0 : index
    %c0_6 = arith.constant 0 : index
    %55 = vector.load %arg3[%c0_5, %c0_6] : memref<32x128xf32, #tpu.memory_space<vmem>>, vector<32x128xf32>
    %cst_7 = arith.constant dense<0.000000e+00> : vector<8x128xf32>
    %56 = tpu.matmul %54, %55, %cst_7 {dimension_numbers = #tpu.dot_dimension_numbers<[1], [0], [0], [1], [0, 0, 1, 1], [], []>} : vector<8x32xf32>, vector<32x128xf32>, vector<8x128xf32> -> vector<8x128xf32>
    %c0_8 = arith.constant 0 : index
    %c0_9 = arith.constant 0 : index
    %57 = vector.load %arg4[%c0_8, %c0_9] : memref<1x128xf32, #tpu.memory_space<vmem>>, vector<1x128xf32>
    %58 = vector.broadcast %57 : vector<1x128xf32> to vector<8x128xf32>
    %59 = arith.addf %56, %58 : vector<8x128xf32>
    %c0_10 = arith.constant 0 : index
    %c0_11 = arith.constant 0 : index
    %60 = vector.load %arg5[%c0_10, %c0_11] : memref<8x128xf32, #tpu.memory_space<vmem>>, vector<8x128xf32>
    tpu.vector_store %arg5[%c0_10, %c0_11], %59 {strides = array<i32>} : memref<8x128xf32, #tpu.memory_space<vmem>>, vector<8x128xf32>,
    return
  }
  func.func @transform_0(%arg0: i32) -> (i32, i32) {
    %c0_i32 = arith.constant 0 : i32
    %c0_i32_0 = arith.constant 0 : i32
    return %arg0, %c0_i32 : i32, i32
  }
  func.func @transform_1(%arg0: i32) -> (i32, i32) {
    %c0_i32 = arith.constant 0 : i32
    %c0_i32_0 = arith.constant 0 : i32
    %c0_i32_1 = arith.constant 0 : i32
    return %c0_i32, %c0_i32_0 : i32, i32
  }
  func.func @transform_2(%arg0: i32) -> (i32, i32) {
    %c0_i32 = arith.constant 0 : i32
    %c0_i32_0 = arith.constant 0 : i32
    %c0_i32_1 = arith.constant 0 : i32
    return %c0_i32, %c0_i32_0 : i32, i32
  }
  func.func @transform_3(%arg0: i32) -> (i32, i32) {
    %c0_i32 = arith.constant 0 : i32
    %c0_i32_0 = arith.constant 0 : i32
    %c0_i32_1 = arith.constant 0 : i32
    return %c0_i32, %c0_i32_0 : i32, i32
  }
  func.func @transform_4(%arg0: i32) -> (i32, i32) {
    %c0_i32 = arith.constant 0 : i32
    %c0_i32_0 = arith.constant 0 : i32
    return %arg0, %c0_i32 : i32, i32
  }
}

</mosaic_0001>

<llo_original>
// kernel: tpu_custom_call.1
$region0: #{tpu_custom_call.1}
  #allocation0 [shape = 'u32[]', space=smem, size = 0x4, offset = 0x4, fixed_abs, tag = 'smem constant byte address 0x4 - core index']
  #allocation1 [shape = 'u32[72,128]{1,0:T(1,128)}', space=vmem, size = 0x9000, scoped, tag = 'internal scratch']
  %s0 = inlined_call_operand.vmem [shape: s32[16,8], index: 0, kind: input, shape index: {}]
  %s1 = inlined_call_operand.vmem [shape: f32[50,32], index: 1, kind: input, shape index: {}]
  %s2 = inlined_call_operand.vmem [shape: f32[32,128], index: 2, kind: input, shape index: {}]
  %s3 = inlined_call_operand.vmem [shape: f32[1,128], index: 3, kind: input, shape index: {}]
  %s4 = inlined_call_operand.hbm [shape: f32[16,128], index: 4, kind: output, shape index: {}]
  %s5 = sld [smem:[#allocation0]]
  $region49: #{tpu_custom_call.1} parent=0
    _
  %s7 = ssub.s32 1, %s5
  %s8 = scalar_select 0, %s7, %s5
  $region1: #{tpu_custom_call.1} parent=0
    #allocation2 [shape = 'u8[8192]{0}', space=vmem, size = 0x2000, scoped, tag = 'output window, operand 0']
    #allocation3 [shape = 's32[2]{0}', space=sflag, size = 0x8, scoped, tag = 'scoped memory for tpu_custom_call.1']
    %9 = vsyncpa [#allocation3], 0
    %s10 = scalar_lea.sflag [#allocation3], 1
    %11 = vsyncpa %s10, 0
    loop: start=0, step=1, limit=4
    $region2: #{tpu_custom_call.1} parent=1 // loop_pre_header
      _
    $region3: #{tpu_custom_call.1} parent=1 // loop_header
      %s13 = sphi 0, %s17
      %p14 = scmp.ge.s32.totalorder %s13, 4
      %s23 = sphi 0, %s25
      %s26 = sphi 0, %s23
      %s27 = sphi 0, %s26
      %s43 = sphi 0, %s27
      %s47 = sphi 0, %s47
      %s49 = sphi 0, %s47
      %s50 = sphi 0, %s49
      %s64 = sphi 0, %s50
      %s68 = sphi 0, %s68
      %s70 = sphi 0, %s68
      %s71 = sphi 0, %s70
      %s85 = sphi 0, %s71
      %s89 = sphi 0, %s89
      %s91 = sphi 0, %s89
      %s92 = sphi 0, %s91
      %s106 = sphi 0, %s92
      %s112 = sphi 0, %s114
      %s115 = sphi 0, %s112
      %s116 = sphi 0, %s115
      %s132 = sphi 0, %s116
    $region4: #{tpu_custom_call.1} parent=1 // loop_header_branch
      %16 = sbr.rel (%p14) target = $region8
    $region5: #{tpu_custom_call.1} parent=1 // loop_body
      %s18 = ssub.s32 %s13, 1
      %s19 = ssub.s32 %s13, 2
      %s20 = sadd.s32 %s13, 1
      %s21 = ssub.s32 %s13, %s20
      %p22 = scmp.eq.s32.totalorder %s21, 0
      %s24 = sadd.s32 %s23, 1
      %s25 = scalar_select %p22, %s23, %s24
      %p28 = pneg %p22
      %p29 = scmp.eq.s32.totalorder %s13, 1
      %p30 = por %p28, %p29
      %p31 = scmp.ne.s32.totalorder %s23, %s26
      %p32 = scmp.eq.s32.totalorder %s13, 0
      %p33 = por %p31, %p32
      %p34 = scmp.ne.s32.totalorder %s23, %s26
      %p35 = scmp.eq.s32.totalorder %s18, 1
      %p36 = por %p34, %p35
      %p37 = scmp.ne.s32.totalorder %s26, %s27
      %p38 = scmp.eq.s32.totalorder %s18, 0
      %p39 = por %p37, %p38
      %p40 = scmp.ne.s32.totalorder %s26, %s27
      %p41 = scmp.eq.s32.totalorder %s19, 1
      %p42 = por %p40, %p41
      %p44 = scmp.ne.s32.totalorder %s27, %s43
      %p45 = scmp.eq.s32.totalorder %s19, 0
      %p46 = por %p44, %p45
      %s48 = sadd.s32 %s47, 1
      %p51 = scmp.eq.s32.totalorder %s13, 1
      %p52 = scmp.ne.s32.totalorder %s47, %s49
      %p53 = scmp.eq.s32.totalorder %s13, 0
      %p54 = por %p52, %p53
      %p55 = scmp.ne.s32.totalorder %s47, %s49
      %p56 = scmp.eq.s32.totalorder %s18, 1
      %p57 = por %p55, %p56
      %p58 = scmp.ne.s32.totalorder %s49, %s50
      %p59 = scmp.eq.s32.totalorder %s18, 0
      %p60 = por %p58, %p59
      %p61 = scmp.ne.s32.totalorder %s49, %s50
      %p62 = scmp.eq.s32.totalorder %s19, 1
      %p63 = por %p61, %p62
      %p65 = scmp.ne.s32.totalorder %s50, %s64
      %p66 = scmp.eq.s32.totalorder %s19, 0
      %p67 = por %p65, %p66
      %s69 = sadd.s32 %s68, 1
      %p72 = scmp.eq.s32.totalorder %s13, 1
      %p73 = scmp.ne.s32.totalorder %s68, %s70
      %p74 = scmp.eq.s32.totalorder %s13, 0
      %p75 = por %p73, %p74
      %p76 = scmp.ne.s32.totalorder %s68, %s70
      %p77 = scmp.eq.s32.totalorder %s18, 1
      %p78 = por %p76, %p77
      %p79 = scmp.ne.s32.totalorder %s70, %s71
      %p80 = scmp.eq.s32.totalorder %s18, 0
      %p81 = por %p79, %p80
      %p82 = scmp.ne.s32.totalorder %s70, %s71
      %p83 = scmp.eq.s32.totalorder %s19, 1
      %p84 = por %p82, %p83
      %p86 = scmp.ne.s32.totalorder %s71, %s85
      %p87 = scmp.eq.s32.totalorder %s19, 0
      %p88 = por %p86, %p87
      %s90 = sadd.s32 %s89, 1
      %p93 = scmp.eq.s32.totalorder %s13, 1
      %p94 = scmp.ne.s32.totalorder %s89, %s91
      %p95 = scmp.eq.s32.totalorder %s13, 0
      %p96 = por %p94, %p95
      %p97 = scmp.ne.s32.totalorder %s89, %s91
      %p98 = scmp.eq.s32.totalorder %s18, 1
      %p99 = por %p97, %p98
      %p100 = scmp.ne.s32.totalorder %s91, %s92
      %p101 = scmp.eq.s32.totalorder %s18, 0
      %p102 = por %p100, %p101
      %p103 = scmp.ne.s32.totalorder %s91, %s92
      %p104 = scmp.eq.s32.totalorder %s19, 1
      %p105 = por %p103, %p104
      %p107 = scmp.ne.s32.totalorder %s92, %s106
      %p108 = scmp.eq.s32.totalorder %s19, 0
      %p109 = por %p107, %p108
      %s110 = ssub.s32 %s13, %s20
      %p111 = scmp.eq.s32.totalorder %s110, 0
      %s113 = sadd.s32 %s112, 1
      %s114 = scalar_select %p111, %s112, %s113
      %p117 = pneg %p111
      %p118 = scmp.eq.s32.totalorder %s13, 1
      %p119 = por %p117, %p118
      %p120 = scmp.ne.s32.totalorder %s112, %s115
      %p121 = scmp.eq.s32.totalorder %s13, 0
      %p122 = por %p120, %p121
      %p123 = scmp.ne.s32.totalorder %s112, %s115
      %p124 = scmp.eq.s32.totalorder %s18, 1
      %p125 = por %p123, %p124
      %p126 = scmp.ne.s32.totalorder %s115, %s116
      %p127 = scmp.eq.s32.totalorder %s18, 0
      %p128 = por %p126, %p127
      %p129 = scmp.ne.s32.totalorder %s115, %s116
      %p130 = scmp.eq.s32.totalorder %s19, 1
      %p131 = por %p129, %p130
      %p133 = scmp.ne.s32.totalorder %s116, %s132
      %p134 = scmp.eq.s32.totalorder %s19, 0
      %p135 = por %p133, %p134
      %p136 = scmp.le.s32.totalorder 1, %s13
      %p137 = scmp.lt.s32.totalorder %s13, 3
      %p138 = pnand %p136, %p137
      %p139 = pneg %p138
      // Predicated region
      $region9: #{tpu_custom_call.1} parent=5 // pred_check
        _
      $region10: #{tpu_custom_call.1} parent=5 // pred_check_branch
        %141 = sbr.rel (%p138) target = $region12
      $region11: #{tpu_custom_call.1} parent=5 // pred_region
        %s142 = ssub.s32 %s13, 1
        // Predicated region
        $region13: #{tpu_custom_call.1} parent=11 // pred_check
          %p143 = pneg %p60
        $region14: #{tpu_custom_call.1} parent=11 // pred_check_branch
          %145 = sbr.rel (%p143) target = $region16
        $region15: #{tpu_custom_call.1} parent=11 // pred_region
          _
        $region16: #{tpu_custom_call.1} parent=11 // pred_fallthru
          _
        // Predicated region
        $region17: #{tpu_custom_call.1} parent=11 // pred_check
          %p146 = pneg %p81
        $region18: #{tpu_custom_call.1} parent=11 // pred_check_branch
          %148 = sbr.rel (%p146) target = $region20
        $region19: #{tpu_custom_call.1} parent=11 // pred_region
          _
        $region20: #{tpu_custom_call.1} parent=11 // pred_fallthru
          _
        // Predicated region
        $region21: #{tpu_custom_call.1} parent=11 // pred_check
          %p149 = pneg %p102
        $region22: #{tpu_custom_call.1} parent=11 // pred_check_branch
          %151 = sbr.rel (%p149) target = $region24
        $region23: #{tpu_custom_call.1} parent=11 // pred_region
          _
        $region24: #{tpu_custom_call.1} parent=11 // pred_fallthru
          _
      $region12: #{tpu_custom_call.1} parent=5 // pred_fallthru
        _
      %p152 = scmp.lt.s32.totalorder %s13, 2
      // Predicated region
      $region25: #{tpu_custom_call.1} parent=5 // pred_check
        %p153 = pneg %p152
      $region26: #{tpu_custom_call.1} parent=5 // pred_check_branch
        %155 = sbr.rel (%p153) target = $region28
      $region27: #{tpu_custom_call.1} parent=5 // pred_region
        // Predicated region
        $region29: #{tpu_custom_call.1} parent=27 // pred_check
          %p156 = pneg %p33
        $region30: #{tpu_custom_call.1} parent=27 // pred_check_branch
          %158 = sbr.rel (%p156) target = $region32
        $region31: #{tpu_custom_call.1} parent=27 // pred_region
          %p159 = scmp.lt.s32.totalorder %s13, 1
          %s160 = scalar_select %p159, %s13, 1
          %s161 = smul.addr %s160, 8
          %s162 = scalar_lea.vmem %s0, %s161
        $region32: #{tpu_custom_call.1} parent=27 // pred_fallthru
          _
      $region28: #{tpu_custom_call.1} parent=5 // pred_fallthru
        _
      %p163 = scmp.le.s32.totalorder 1, %s13
      %p164 = scmp.lt.s32.totalorder %s13, 3
      %p165 = pnand %p163, %p164
      %p166 = pneg %p165
      // Predicated region
      $region33: #{tpu_custom_call.1} parent=5 // pred_check
        _
      $region34: #{tpu_custom_call.1} parent=5 // pred_check_branch
        %168 = sbr.rel (%p165) target = $region36
      $region35: #{tpu_custom_call.1} parent=5 // pred_region
        %s169 = ssub.s32 %s13, 1
        %p170 = scmp.lt.s32.totalorder %s18, 1
        %s171 = scalar_select %p170, %s18, 1
        %s172 = smul.addr %s171, 8
        %s173 = scalar_lea.vmem %s0, %s172
        %p174 = pneg %p39
        %p175 = pneg %p36
        %p176 = pneg %p60
        %p177 = pneg %p57
        %p178 = pneg %p81
        %p179 = pneg %p78
        %p180 = pneg %p102
        %p181 = pneg %p99
        %p182 = pneg %p128
        %p183 = pneg %p125
        %s184 = sand.u32 %s115, 1
        %s185 = scalar_lea.sflag [#allocation3], %s184
        %s186 = sand.u32 %s115, 1
        %s187 = smul.addr %s186, 8
        %s188 = scalar_lea.vmem [#allocation2], %s187
        %p189 = scmp.lt.s32.totalorder %s18, 1
        %s190 = scalar_select %p189, %s18, 1
        %s191 = smul.addr %s190, 8
        %s192 = scalar_lea.vmem %s0, %s191
        %v193 = vld [vmem:[%s192] sm:$0xff]
        %v194 = vlaneseq
        %v195 = vand.u32 %v194, 127
        %196 = vset.pattern.permute.xlu0 0
        %197 = vperm.xlu0 %196, %v193
        %v198 = vpop.permute.xlu0 %197
        %vm199 = vcmp.eq.s32.totalorder %v198, %v195
        %v200 = vsel %vm199, 1, 0
        %v201 = vcvt.s32.f32 %v200
        %v202 = vadd.f32 %v201, 0.0
        %203 = vset.pattern.permute.xlu0 1
        %204 = vperm.xlu0 %203, %v193
        %v205 = vpop.permute.xlu0 %204
        %vm206 = vcmp.eq.s32.totalorder %v205, %v195
        %v207 = vsel %vm206, 1, 0
        %v208 = vcvt.s32.f32 %v207
        %v209 = vadd.f32 %v202, %v208
        %210 = vset.pattern.permute.xlu0 2
        %211 = vperm.xlu0 %210, %v193
        %v212 = vpop.permute.xlu0 %211
        %vm213 = vcmp.eq.s32.totalorder %v212, %v195
        %v214 = vsel %vm213, 1, 0
        %v215 = vcvt.s32.f32 %v214
        %v216 = vadd.f32 %v209, %v215
        %217 = vset.pattern.permute.xlu0 3
        %218 = vperm.xlu0 %217, %v193
        %v219 = vpop.permute.xlu0 %218
        %vm220 = vcmp.eq.s32.totalorder %v219, %v195
        %v221 = vsel %vm220, 1, 0
        %v222 = vcvt.s32.f32 %v221
        %v223 = vadd.f32 %v216, %v222
        %224 = vset.pattern.permute.xlu0 4
        %225 = vperm.xlu0 %224, %v193
        %v226 = vpop.permute.xlu0 %225
        %vm227 = vcmp.eq.s32.totalorder %v226, %v195
        %v228 = vsel %vm227, 1, 0
        %v229 = vcvt.s32.f32 %v228
        %v230 = vadd.f32 %v223, %v229
        %231 = vset.pattern.permute.xlu0 5
        %232 = vperm.xlu0 %231, %v193
        %v233 = vpop.permute.xlu0 %232
        %vm234 = vcmp.eq.s32.totalorder %v233, %v195
        %v235 = vsel %vm234, 1, 0
        %v236 = vcvt.s32.f32 %v235
        %v237 = vadd.f32 %v230, %v236
        %238 = vset.pattern.permute.xlu0 6
        %239 = vperm.xlu0 %238, %v193
        %v240 = vpop.permute.xlu0 %239
        %vm241 = vcmp.eq.s32.totalorder %v240, %v195
        %v242 = vsel %vm241, 1, 0
        %v243 = vcvt.s32.f32 %v242
        %v244 = vadd.f32 %v237, %v243
        %245 = vset.pattern.permute.xlu0 7
        %246 = vperm.xlu0 %245, %v193
        %v247 = vpop.permute.xlu0 %246
        %vm248 = vcmp.eq.s32.totalorder %v247, %v195
        %v249 = vsel %vm248, 1, 0
        %v250 = vcvt.s32.f32 %v249
        %v251 = vadd.f32 %v244, %v250
        %v252 = vmul.f32 %v251, 0.125
        %v253 = vld [vmem:[%s1] sm:$0xff]
        %v254 = vld [vmem:[%s1 + $0x8] sm:$0xff]
        %v255 = vld [vmem:[%s1 + $0x10] sm:$0xff]
        %v256 = vld [vmem:[%s1 + $0x18] sm:$0xff]
        %v257 = vld [vmem:[%s1 + $0x20] sm:$0xff]
        %v258 = vld [vmem:[%s1 + $0x28] sm:$0xff]
        %v259 = vld [vmem:[%s1 + $0x30] sm:$0x3]
        %vm260 = vcmask 408576
        %v262 = vsel %vm260, %v252, 0
        %vm264 = vcmask 1041408
        %v266 = vsel %vm264, %v259, 0
        %268 = vmatpush.msra.mxu0 0.0
        %269 = vmatpush.msra.mxu0 0.0
        %270 = vmatpush.msra.mxu0 0.0
        %271 = vmatpush.msra.mxu0 0.0
        %272 = vmatpush.msra.mxu0 0.0
        %273 = vmatpush.msra.mxu0 0.0
        %274 = vmatpush.msra.mxu0 0.0
        %275 = vmatpush.msra.mxu0 0.0
        %276 = vmatpush.msra.mxu0 0.0
        %277 = vmatpush.msra.mxu0 %v266
        %278 = vmatpush.msra.mxu0 %v258
        %279 = vmatpush.msra.mxu0 %v257
        %280 = vmatpush.msra.mxu0 %v256
        %281 = vmatpush.msra.mxu0 %v255
        %282 = vmatpush.msra.mxu0 %v254
        %283 = vmatpush.msra.mxu0 %v253
        %284 = vmatmul.f32.gmra.mxu0 %v262
        %v285 = vpop.f32.mrf.mxu0
        %v286 = vadd.f32 0.0, %v285
        %287 = vdwg.mxu0
        %v288 = vld [vmem:[%s2] sm:$0xff]
        %v289 = vld [vmem:[%s2 + $0x8] sm:$0xff]
        %v290 = vld [vmem:[%s2 + $0x10] sm:$0xff]
        %v291 = vld [vmem:[%s2 + $0x18] sm:$0xff]
        %v292 = vld [vmem:[%s3] sm:$0x1]
        %v294 = vperm.slane %v292, 0
        %vm296 = vcmask 261120
        %v298 = vsel %vm296, %v286, 0
        %300 = vmatpush.msra.mxu0 0.0
        %301 = vmatpush.msra.mxu0 0.0
        %302 = vmatpush.msra.mxu0 0.0
        %303 = vmatpush.msra.mxu0 0.0
        %304 = vmatpush.msra.mxu0 0.0
        %305 = vmatpush.msra.mxu0 0.0
        %306 = vmatpush.msra.mxu0 0.0
        %307 = vmatpush.msra.mxu0 0.0
        %308 = vmatpush.msra.mxu0 0.0
        %309 = vmatpush.msra.mxu0 0.0
        %310 = vmatpush.msra.mxu0 0.0
        %311 = vmatpush.msra.mxu0 0.0
        %312 = vmatpush.msra.mxu0 %v291
        %313 = vmatpush.msra.mxu0 %v290
        %314 = vmatpush.msra.mxu0 %v289
        %315 = vmatpush.msra.mxu0 %v288
        %316 = vmatmul.f32.gmra.mxu0 %v298
        %v317 = vpop.f32.mrf.mxu0
        %v318 = vadd.f32 %v294, %v317
        %319 = vdwg.mxu0
        %320 = vst [vmem:[%s188] sm:$0xff] %v318
        %s321 = sand.u32 %s115, 1
        %s322 = scalar_lea.sflag [#allocation3], %s321
        %s323 = sand.u32 %s115, 1
        %s324 = smul.addr %s323, 8
        %s325 = scalar_lea.vmem [#allocation2], %s324
        // Predicated region
        $region37: #{tpu_custom_call.1} parent=35 // pred_check
          %p326 = pneg %p125
        $region38: #{tpu_custom_call.1} parent=35 // pred_check_branch
          %328 = sbr.rel (%p326) target = $region40
        $region39: #{tpu_custom_call.1} parent=35 // pred_region
          %330 = vsyncadd %s322, 0
          %s331 = smul.addr %s18, 8
          %s332 = scalar_lea.hbm %s4, %s331
          %s334 = sshll.u32 %s325, 4
          %s335 = int_to_ptr.vmem [resolvable:$true] %s334
          %s336 = sshll.u32 %s332, 4
          %s337 = int_to_ptr.hbm [resolvable:$true] %s336
          %339 = dma.vmem_to_hbm [thread:$0]  %s335, 128, %s337, %s322
        $region40: #{tpu_custom_call.1} parent=35 // pred_fallthru
          _
      $region36: #{tpu_custom_call.1} parent=5 // pred_fallthru
        _
      %p340 = scmp.le.s32.totalorder 2, %s13
      // Predicated region
      $region41: #{tpu_custom_call.1} parent=5 // pred_check
        %p341 = pneg %p340
      $region42: #{tpu_custom_call.1} parent=5 // pred_check_branch
        %343 = sbr.rel (%p341) target = $region44
      $region43: #{tpu_custom_call.1} parent=5 // pred_region
        %s344 = ssub.s32 %s13, 2
        // Predicated region
        $region45: #{tpu_custom_call.1} parent=43 // pred_check
          %p345 = pneg %p131
        $region46: #{tpu_custom_call.1} parent=43 // pred_check_branch
          %347 = sbr.rel (%p345) target = $region48
        $region47: #{tpu_custom_call.1} parent=43 // pred_region
          %s348 = sand.u32 %s116, 1
          %s349 = scalar_lea.sflag [#allocation3], %s348
          %s350 = sand.u32 %s116, 1
          %s351 = smul.addr %s350, 8
          %s352 = scalar_lea.vmem [#allocation2], %s351
          %354 = dma.done %s349, 128
        $region48: #{tpu_custom_call.1} parent=43 // pred_fallthru
          _
      $region44: #{tpu_custom_call.1} parent=5 // pred_fallthru
        _
    $region6: #{tpu_custom_call.1} parent=1 // loop_footer
      %s17 = sadd.s32 1, %s13
    $region7: #{tpu_custom_call.1} parent=1 // loop_footer_branch
      %12 = sbr.rel target = $region3
    $region8: #{tpu_custom_call.1} parent=1 // loop_exit
      _
    %355 = vsyncpa [#allocation3], 1
    %s356 = scalar_lea.sflag [#allocation3], 1
    %357 = vsyncpa %s356, 1

</llo_original>
